<compile_context>
chip_gen: v7x
topology: tpu7x:2x2x1
jax: 0.10.0
libtpu: 0.0.40
codegen_flags: <defaults>
</compile_context>

<pallas_src>
import jax
import jax.numpy as jnp
from jax.experimental import pallas as pl
from jax.experimental.pallas import tpu as pltpu


def policy_kernel(xT_ref, w1_ref, b1_ref, w2_ref, b2_ref, outT_ref):
    """One batch tile in transposed (feature, batch) layout.

    xT_ref:  (n_inputs, TB)     lane axis = batch (lane-dense)
    w1_ref:  (size, n_inputs)   b1_ref: (size, 1)
    w2_ref:  (n_out, size)      b2_ref: (n_out, 1)
    outT_ref: (n_out, TB)
    """
    # fc1 + ReLU:  hT = relu(W1 @ xT + b1)  -> (size, TB), batch lane-dense.
    hT = jnp.dot(w1_ref[...], xT_ref[...], preferred_element_type=jnp.float32)
    hT = jnp.maximum(hT + b1_ref[...], 0.0)

    # fc2:  logitsT = W2 @ hT + b2  -> (n_out, TB).  Keep both matmul operands
    # in the (possibly bf16) weight dtype; accumulate in f32.
    logitsT = jnp.dot(w2_ref[...], hT.astype(w2_ref.dtype),
                      preferred_element_type=jnp.float32) + b2_ref[...]

    n_out = logitsT.shape[0]
    if n_out == 2:
        # 2-action specialization: exact, max-stable, no axis-0 reductions,
        # no divide.  p0 + p1 == 1 to ~1 ulp.
        d = logitsT[1:2, :] - logitsT[0:1, :]
        p0 = 1.0 / (1.0 + jnp.exp(d))
        p1 = 1.0 / (1.0 + jnp.exp(-d))
        outT_ref[pl.ds(0, 1), :] = p0.astype(outT_ref.dtype)
        outT_ref[pl.ds(1, 1), :] = p1.astype(outT_ref.dtype)
    else:
        # Numerically stable softmax over the action axis (axis 0); exact
        # divide since downstream computes log-probs from these.
        m = jnp.max(logitsT, axis=0, keepdims=True)
        e = jnp.exp(logitsT - m)
        outT_ref[...] = (e / jnp.sum(e, axis=0, keepdims=True)).astype(outT_ref.dtype)


def _round_up(v, m):
    return ((v + m - 1) // m) * m


def _pick_tb(batch, n_in, n_out, x_itemsize, *, tb_max=64 * 1024,
             vmem_tile_budget=16 << 20):
    """Batch-tile (lane) width.

    Multiple of 128 (or full extent for tiny B), sized so the double-buffered
    x/out tiles stay well under the scoped VMEM default on every chip, and
    chosen so the grid has >= 2 steps whenever B allows (both v7x TCs busy).
    """
    if batch < 256:
        return batch  # single full-extent block (last block dim == extent)
    per_col = 2 * (n_in * x_itemsize + n_out * 4)  # double-buffered bytes/col
    cap = max(128, (vmem_tile_budget // per_col) // 128 * 128)
    tb_max = min(tb_max, cap)
    # ~half the batch rounded up to a multiple of 128, capped so huge
    # rollouts tile at ~64K columns (>= ~1 MB/step payload -> HBM roofline).
    return min(tb_max, _round_up((batch + 1) // 2, 128))


def _xla_forward_t(xT, w1, b1, w2, b2):
    """Fused pure-XLA path for tiny batches (feature-major in/out)."""
    h = jnp.maximum(jnp.dot(w1, xT.astype(w1.dtype)) + b1, 0.0)
    logits = jnp.dot(w2, h) + b2
    return jax.nn.softmax(logits, axis=0)


def policy_forward_t(xT, w1, b1, w2, b2, *, force_pallas=False,
                     xla_threshold=2048):
    """Feature-major forward: xT is (n_inputs, B); returns (n_out, B).

    This is the rollout fast path: no layout conversion in HBM, the batch
    axis rides the 128-lane axis end to end.
    """
    n_in, B = xT.shape
    size = w1.shape[0]
    n_out = w2.shape[0]

    # Tiny/interactive batches: a fused XLA graph beats pallas_call launch +
    # grid-step overhead.
    if B <= xla_threshold and not force_pallas:
        return _xla_forward_t(xT, w1, b1, w2, b2)

    # bf16 observations (producer-side dtype) -> native MXU bf16 path; cast
    # the tiny weights once to match.  Biases stay f32 (added to f32 acc).
    if xT.dtype == jnp.bfloat16:
        w1 = w1.astype(jnp.bfloat16)
        w2 = w2.astype(jnp.bfloat16)
    b1 = b1.astype(jnp.float32)
    b2 = b2.astype(jnp.float32)

    TB = _pick_tb(B, n_in, n_out, xT.dtype.itemsize)
    grid = (pl.cdiv(B, TB),)

    outT = pl.pallas_call(
        policy_kernel,
        out_shape=jax.ShapeDtypeStruct((n_out, B), jnp.float32),
        grid=grid,
        in_specs=[
            # x streams tile-by-tile along the batch (lane) axis.
            pl.BlockSpec((n_in, TB), lambda i: (0, i)),
            # Parameters: constant index maps -> fetched once, VMEM-resident.
            pl.BlockSpec((size, n_in), lambda i: (0, 0)),
            pl.BlockSpec((size, 1), lambda i: (0, 0)),
            pl.BlockSpec((n_out, size), lambda i: (0, 0)),
            pl.BlockSpec((n_out, 1), lambda i: (0, 0)),
        ],
        out_specs=pl.BlockSpec((n_out, TB), lambda i: (0, i)),
        compiler_params=pltpu.CompilerParams(
            # Batch tiles are independent -> shard across both TCs on v7x
            # (no-op on single-TC v5e/v6e).
            dimension_semantics=("parallel",),
        ),
    )(xT, w1, b1, w2, b2)
    return outT


def policy_forward(x, w1, b1, w2, b2, **kwargs):
    """(B, n_inputs) -> (B, n_out) compatibility wrapper.

    Prefer `policy_forward_t`: each transpose here is an extra HBM round trip
    on a memory-bound op.  Kept only for PyTorch API parity / tiny batches.
    """
    return policy_forward_t(x.T, w1, b1, w2, b2, **kwargs).T


def init_policy_params(key, n_inputs, n_outputs, size=32):
    """PyTorch nn.Linear default init U[-1/sqrt(fan_in), 1/sqrt(fan_in)],
    stored in native (out_features, in_features) layout; biases as columns."""
    k1, k2, k3, k4 = jax.random.split(key, 4)
    bound1 = 1.0 / jnp.sqrt(jnp.float32(n_inputs))
    bound2 = 1.0 / jnp.sqrt(jnp.float32(size))
    w1 = jax.random.uniform(k1, (size, n_inputs), jnp.float32, -bound1, bound1)
    b1 = jax.random.uniform(k2, (size, 1), jnp.float32, -bound1, bound1)
    w2 = jax.random.uniform(k3, (n_outputs, size), jnp.float32, -bound2, bound2)
    b2 = jax.random.uniform(k4, (n_outputs, 1), jnp.float32, -bound2, bound2)
    return w1, b1, w2, b2


def _reference(x, w1, b1, w2, b2):
    h = jnp.maximum(x @ w1.T + b1[:, 0], 0.0)
    logits = h @ w2.T + b2[:, 0]
    return jax.nn.softmax(logits, axis=-1)


if __name__ == "__main__":
    # CartPole-like policy: 4 observations -> 2 actions, hidden size 32.
    n_inputs, n_outputs, size = 4, 2, 32

    key = jax.random.PRNGKey(0)
    k_p2, k_p6, k_x1, k_x2, k_x3, k_x4 = jax.random.split(key, 6)
    w1, b1, w2, b2 = init_policy_params(k_p2, n_inputs, n_outputs, size)

    # 1) Feature-major rollout batch (f32): 2 pipelined tiles, 2-action path.
    B = 1024
    xT = jax.random.normal(k_x1, (n_inputs, B), jnp.float32)
    outT = jax.block_until_ready(
        policy_forward_t(xT, w1, b1, w2, b2, force_pallas=True))
    ref = _reference(xT.T, w1, b1, w2, b2)
    assert outT.shape == (n_outputs, B)
    assert jnp.allclose(outT.T, ref, atol=2e-3, rtol=2e-3)
    assert jnp.allclose(jnp.sum(outT, axis=0), 1.0, atol=1e-4)

    # 2) bf16 observations (producer-side dtype): native MXU bf16 path.
    xT_bf = xT.astype(jnp.bfloat16)
    outT_bf = jax.block_until_ready(
        policy_forward_t(xT_bf, w1, b1, w2, b2, force_pallas=True))
    ref_bf = _reference(xT_bf.astype(jnp.float32).T, w1, b1, w2, b2)
    assert jnp.allclose(outT_bf.T, ref_bf, atol=2e-2, rtol=2e-2)

    # 3) Ragged batch (B % TB != 0): masked last tile.
    B_r = 1000
    xT_r = jax.random.normal(k_x2, (n_inputs, B_r), jnp.float32)
    outT_r = jax.block_until_ready(
        policy_forward_t(xT_r, w1, b1, w2, b2, force_pallas=True))
    ref_r = _reference(xT_r.T, w1, b1, w2, b2)
    assert jnp.allclose(outT_r.T, ref_r, atol=2e-3, rtol=2e-3)

    # 4) Generic softmax path (n_out != 2).
    w1g, b1g, w2g, b2g = init_policy_params(k_p6, n_inputs, 6, size)
    B_g = 512
    xT_g = jax.random.normal(k_x3, (n_inputs, B_g), jnp.float32)
    outT_g = jax.block_until_ready(
        policy_forward_t(xT_g, w1g, b1g, w2g, b2g, force_pallas=True))
    ref_g = _reference(xT_g.T, w1g, b1g, w2g, b2g)
    assert jnp.allclose(outT_g.T, ref_g, atol=2e-3, rtol=2e-3)
    assert jnp.allclose(jnp.sum(outT_g, axis=0), 1.0, atol=1e-4)

    # 5) Tiny batch via the PyTorch-layout compat wrapper:
    #    a) default -> fused XLA fast path; b) forced -> single-block Pallas.
    B_s = 8
    x_s = jax.random.normal(k_x4, (B_s, n_inputs), jnp.float32)
    ref_s = _reference(x_s, w1, b1, w2, b2)
    out_s_xla = jax.block_until_ready(policy_forward(x_s, w1, b1, w2, b2))
    out_s_pl = jax.block_until_ready(
        policy_forward(x_s, w1, b1, w2, b2, force_pallas=True))
    assert out_s_xla.shape == (B_s, n_outputs)
    assert jnp.allclose(out_s_xla, ref_s, atol=2e-3, rtol=2e-3)
    assert jnp.allclose(out_s_pl, ref_s, atol=2e-3, rtol=2e-3)

    print("KERNEL_OK")
</pallas_src>

<mosaic_0001>
module attributes {stable_mosaic.version = 11 : i64} {
  func.func @policy_kernel(%arg0: i32, %arg1: memref<4x512xf32, #tpu.memory_space<vmem>>, %arg2: memref<32x4xf32, #tpu.memory_space<vmem>>, %arg3: memref<32x1xf32, #tpu.memory_space<vmem>>, %arg4: memref<2x32xf32, #tpu.memory_space<vmem>>, %arg5: memref<2x1xf32, #tpu.memory_space<vmem>>, %arg6: memref<2x512xf32, #tpu.memory_space<vmem>>) attributes {dimension_semantics = [#tpu.dimension_semantics<parallel>], iteration_bounds = array<i64: 2>, scalar_prefetch = 0 : i64, scratch_operands = 0 : i64, tpu.core_type = #tpu.core_type<tc>, window_params = [{transform_indices = @transform_0, window_bounds = array<i64: 4, 512>}, {pipeline_mode = #tpu.pipeline_mode<synchronous>, transform_indices = @transform_1, window_bounds = array<i64: 32, 4>}, {pipeline_mode = #tpu.pipeline_mode<synchronous>, transform_indices = @transform_2, window_bounds = array<i64: 32, 1>}, {pipeline_mode = #tpu.pipeline_mode<synchronous>, transform_indices = @transform_3, window_bounds = array<i64: 2, 32>}, {pipeline_mode = #tpu.pipeline_mode<synchronous>, transform_indices = @transform_4, window_bounds = array<i64: 2, 1>}, {transform_indices = @transform_5, window_bounds = array<i64: 2, 512>}]} {
    %c0 = arith.constant 0 : index
    %c0_0 = arith.constant 0 : index
    %0 = vector.load %arg2[%c0, %c0_0] : memref<32x4xf32, #tpu.memory_space<vmem>>, vector<32x4xf32>
    %c0_1 = arith.constant 0 : index
    %c0_2 = arith.constant 0 : index
    %1 = vector.load %arg1[%c0_1, %c0_2] : memref<4x512xf32, #tpu.memory_space<vmem>>, vector<4x512xf32>
    %cst = arith.constant dense<0.000000e+00> : vector<32x512xf32>
    %2 = tpu.matmul %0, %1, %cst {dimension_numbers = #tpu.dot_dimension_numbers<[1], [0], [0], [1], [0, 0, 1, 1], [], []>} : vector<32x4xf32>, vector<4x512xf32>, vector<32x512xf32> -> vector<32x512xf32>
    %c0_3 = arith.constant 0 : index
    %c0_4 = arith.constant 0 : index
    %3 = vector.load %arg3[%c0_3, %c0_4] : memref<32x1xf32, #tpu.memory_space<vmem>>, vector<32x1xf32>
    %4 = vector.broadcast %3 : vector<32x1xf32> to vector<32x512xf32>
    %5 = arith.addf %2, %4 : vector<32x512xf32>
    %cst_5 = arith.constant 0.000000e+00 : f32
    %6 = vector.broadcast %cst_5 : f32 to vector<32x512xf32>
    %7 = arith.maximumf %5, %6 : vector<32x512xf32>
    %c0_6 = arith.constant 0 : index
    %c0_7 = arith.constant 0 : index
    %8 = vector.load %arg4[%c0_6, %c0_7] : memref<2x32xf32, #tpu.memory_space<vmem>>, vector<2x32xf32>
    %cst_8 = arith.constant dense<0.000000e+00> : vector<2x512xf32>
    %9 = tpu.matmul %8, %7, %cst_8 {dimension_numbers = #tpu.dot_dimension_numbers<[1], [0], [0], [1], [0, 0, 1, 1], [], []>} : vector<2x32xf32>, vector<32x512xf32>, vector<2x512xf32> -> vector<2x512xf32>
    %c0_9 = arith.constant 0 : index
    %c0_10 = arith.constant 0 : index
    %10 = vector.load %arg5[%c0_9, %c0_10] : memref<2x1xf32, #tpu.memory_space<vmem>>, vector<2x1xf32>
    %11 = vector.broadcast %10 : vector<2x1xf32> to vector<2x512xf32>
    %12 = arith.addf %9, %11 : vector<2x512xf32>
    %13 = vector.extract_strided_slice %12 {offsets = [1, 0], sizes = [1, 512], strides = [1, 1]} : vector<2x512xf32> to vector<1x512xf32>
    %14 = vector.extract_strided_slice %12 {offsets = [0, 0], sizes = [1, 512], strides = [1, 1]} : vector<2x512xf32> to vector<1x512xf32>
    %15 = arith.subf %13, %14 : vector<1x512xf32>
    %16 = math.exp %15 : vector<1x512xf32>
    %cst_11 = arith.constant 1.000000e+00 : f32
    %17 = vector.broadcast %cst_11 : f32 to vector<1x512xf32>
    %18 = arith.addf %17, %16 : vector<1x512xf32>
    %cst_12 = arith.constant 1.000000e+00 : f32
    %19 = vector.broadcast %cst_12 : f32 to vector<1x512xf32>
    %20 = arith.divf %19, %18 : vector<1x512xf32>
    %cst_13 = arith.constant 0.000000e+00 : f32
    %21 = vector.broadcast %cst_13 : f32 to vector<1x512xf32>
    %22 = arith.subf %21, %15 : vector<1x512xf32>
    %23 = math.exp %22 : vector<1x512xf32>
    %cst_14 = arith.constant 1.000000e+00 : f32
    %24 = vector.broadcast %cst_14 : f32 to vector<1x512xf32>
    %25 = arith.addf %24, %23 : vector<1x512xf32>
    %cst_15 = arith.constant 1.000000e+00 : f32
    %26 = vector.broadcast %cst_15 : f32 to vector<1x512xf32>
    %27 = arith.divf %26, %25 : vector<1x512xf32>
    %c0_16 = arith.constant 0 : index
    %c0_17 = arith.constant 0 : index
    %28 = vector.load %arg6[%c0_16, %c0_17] : memref<2x512xf32, #tpu.memory_space<vmem>>, vector<1x512xf32>
    tpu.vector_store %arg6[%c0_16, %c0_17], %20 {strides = array<i32>} : memref<2x512xf32, #tpu.memory_space<vmem>>, vector<1x512xf32>,
    %c1 = arith.constant 1 : index
    %c0_18 = arith.constant 0 : index
    %29 = vector.load %arg6[%c1, %c0_18] : memref<2x512xf32, #tpu.memory_space<vmem>>, vector<1x512xf32>
    tpu.vector_store %arg6[%c1, %c0_18], %27 {strides = array<i32>} : memref<2x512xf32, #tpu.memory_space<vmem>>, vector<1x512xf32>,
    return
  }
  func.func @transform_0(%arg0: i32) -> (i32, i32) {
    %c0_i32 = arith.constant 0 : i32
    %c0_i32_0 = arith.constant 0 : i32
    return %c0_i32, %arg0 : i32, i32
  }
  func.func @transform_1(%arg0: i32) -> (i32, i32) {
    %c0_i32 = arith.constant 0 : i32
    %c0_i32_0 = arith.constant 0 : i32
    %c0_i32_1 = arith.constant 0 : i32
    return %c0_i32, %c0_i32_0 : i32, i32
  }
  func.func @transform_2(%arg0: i32) -> (i32, i32) {
    %c0_i32 = arith.constant 0 : i32
    %c0_i32_0 = arith.constant 0 : i32
    %c0_i32_1 = arith.constant 0 : i32
    return %c0_i32, %c0_i32_0 : i32, i32
  }
  func.func @transform_3(%arg0: i32) -> (i32, i32) {
    %c0_i32 = arith.constant 0 : i32
    %c0_i32_0 = arith.constant 0 : i32
    %c0_i32_1 = arith.constant 0 : i32
    return %c0_i32, %c0_i32_0 : i32, i32
  }
  func.func @transform_4(%arg0: i32) -> (i32, i32) {
    %c0_i32 = arith.constant 0 : i32
    %c0_i32_0 = arith.constant 0 : i32
    %c0_i32_1 = arith.constant 0 : i32
    return %c0_i32, %c0_i32_0 : i32, i32
  }
  func.func @transform_5(%arg0: i32) -> (i32, i32) {
    %c0_i32 = arith.constant 0 : i32
    %c0_i32_0 = arith.constant 0 : i32
    return %c0_i32, %arg0 : i32, i32
  }
}

</mosaic_0001>

<llo_original>
// kernel: tpu_custom_call.1
$region0: #{tpu_custom_call.1}
  #allocation0 [shape = 'u32[]', space=smem, size = 0x4, offset = 0x4, fixed_abs, tag = 'smem constant byte address 0x4 - core index']
  #allocation1 [shape = 'u32[144,128]{1,0:T(1,128)}', space=vmem, size = 0x12000, scoped, tag = 'internal scratch']
  %s0 = inlined_call_operand.vmem [shape: f32[4,1024], index: 0, kind: input, shape index: {}]
  %s1 = inlined_call_operand.vmem [shape: f32[32,4], index: 1, kind: input, shape index: {}]
  %s2 = inlined_call_operand.vmem [shape: f32[32,1], index: 2, kind: input, shape index: {}]
  %s3 = inlined_call_operand.vmem [shape: f32[2,32], index: 3, kind: input, shape index: {}]
  %s4 = inlined_call_operand.vmem [shape: f32[2,1], index: 4, kind: input, shape index: {}]
  %s5 = inlined_call_operand.hbm [shape: f32[2,1024], index: 5, kind: output, shape index: {}]
  %s6 = sld [smem:[#allocation0]]
  $region53: #{tpu_custom_call.1} parent=0
    _
  %s8 = ssub.s32 1, %s6
  %s9 = scalar_select 0, %s8, %s6
  $region1: #{tpu_custom_call.1} parent=0
    #allocation2 [shape = 'u8[8192]{0}', space=vmem, size = 0x2000, scoped, tag = 'output window, operand 0']
    #allocation3 [shape = 's32[2]{0}', space=sflag, size = 0x8, scoped, tag = 'scoped memory for tpu_custom_call.1']
    %10 = vsyncpa [#allocation3], 0
    %s11 = scalar_lea.sflag [#allocation3], 1
    %12 = vsyncpa %s11, 0
    loop: start=0, step=1, limit=4
    $region2: #{tpu_custom_call.1} parent=1 // loop_pre_header
      _
    $region3: #{tpu_custom_call.1} parent=1 // loop_header
      %s14 = sphi 0, %s18
      %p15 = scmp.ge.s32.totalorder %s14, 4
      %s24 = sphi 0, %s26
      %s27 = sphi 0, %s24
      %s28 = sphi 0, %s27
      %s44 = sphi 0, %s28
      %s48 = sphi 0, %s48
      %s50 = sphi 0, %s48
      %s51 = sphi 0, %s50
      %s65 = sphi 0, %s51
      %s69 = sphi 0, %s69
      %s71 = sphi 0, %s69
      %s72 = sphi 0, %s71
      %s86 = sphi 0, %s72
      %s90 = sphi 0, %s90
      %s92 = sphi 0, %s90
      %s93 = sphi 0, %s92
      %s107 = sphi 0, %s93
      %s111 = sphi 0, %s111
      %s113 = sphi 0, %s111
      %s114 = sphi 0, %s113
      %s128 = sphi 0, %s114
      %s134 = sphi 0, %s136
      %s137 = sphi 0, %s134
      %s138 = sphi 0, %s137
      %s154 = sphi 0, %s138
    $region4: #{tpu_custom_call.1} parent=1 // loop_header_branch
      %17 = sbr.rel (%p15) target = $region8
    $region5: #{tpu_custom_call.1} parent=1 // loop_body
      %s19 = ssub.s32 %s14, 1
      %s20 = ssub.s32 %s14, 2
      %s21 = sadd.s32 %s14, 1
      %s22 = ssub.s32 %s14, %s21
      %p23 = scmp.eq.s32.totalorder %s22, 0
      %s25 = sadd.s32 %s24, 1
      %s26 = scalar_select %p23, %s24, %s25
      %p29 = pneg %p23
      %p30 = scmp.eq.s32.totalorder %s14, 1
      %p31 = por %p29, %p30
      %p32 = scmp.ne.s32.totalorder %s24, %s27
      %p33 = scmp.eq.s32.totalorder %s14, 0
      %p34 = por %p32, %p33
      %p35 = scmp.ne.s32.totalorder %s24, %s27
      %p36 = scmp.eq.s32.totalorder %s19, 1
      %p37 = por %p35, %p36
      %p38 = scmp.ne.s32.totalorder %s27, %s28
      %p39 = scmp.eq.s32.totalorder %s19, 0
      %p40 = por %p38, %p39
      %p41 = scmp.ne.s32.totalorder %s27, %s28
      %p42 = scmp.eq.s32.totalorder %s20, 1
      %p43 = por %p41, %p42
      %p45 = scmp.ne.s32.totalorder %s28, %s44
      %p46 = scmp.eq.s32.totalorder %s20, 0
      %p47 = por %p45, %p46
      %s49 = sadd.s32 %s48, 1
      %p52 = scmp.eq.s32.totalorder %s14, 1
      %p53 = scmp.ne.s32.totalorder %s48, %s50
      %p54 = scmp.eq.s32.totalorder %s14, 0
      %p55 = por %p53, %p54
      %p56 = scmp.ne.s32.totalorder %s48, %s50
      %p57 = scmp.eq.s32.totalorder %s19, 1
      %p58 = por %p56, %p57
      %p59 = scmp.ne.s32.totalorder %s50, %s51
      %p60 = scmp.eq.s32.totalorder %s19, 0
      %p61 = por %p59, %p60
      %p62 = scmp.ne.s32.totalorder %s50, %s51
      %p63 = scmp.eq.s32.totalorder %s20, 1
      %p64 = por %p62, %p63
      %p66 = scmp.ne.s32.totalorder %s51, %s65
      %p67 = scmp.eq.s32.totalorder %s20, 0
      %p68 = por %p66, %p67
      %s70 = sadd.s32 %s69, 1
      %p73 = scmp.eq.s32.totalorder %s14, 1
      %p74 = scmp.ne.s32.totalorder %s69, %s71
      %p75 = scmp.eq.s32.totalorder %s14, 0
      %p76 = por %p74, %p75
      %p77 = scmp.ne.s32.totalorder %s69, %s71
      %p78 = scmp.eq.s32.totalorder %s19, 1
      %p79 = por %p77, %p78
      %p80 = scmp.ne.s32.totalorder %s71, %s72
      %p81 = scmp.eq.s32.totalorder %s19, 0
      %p82 = por %p80, %p81
      %p83 = scmp.ne.s32.totalorder %s71, %s72
      %p84 = scmp.eq.s32.totalorder %s20, 1
      %p85 = por %p83, %p84
      %p87 = scmp.ne.s32.totalorder %s72, %s86
      %p88 = scmp.eq.s32.totalorder %s20, 0
      %p89 = por %p87, %p88
      %s91 = sadd.s32 %s90, 1
      %p94 = scmp.eq.s32.totalorder %s14, 1
      %p95 = scmp.ne.s32.totalorder %s90, %s92
      %p96 = scmp.eq.s32.totalorder %s14, 0
      %p97 = por %p95, %p96
      %p98 = scmp.ne.s32.totalorder %s90, %s92
      %p99 = scmp.eq.s32.totalorder %s19, 1
      %p100 = por %p98, %p99
      %p101 = scmp.ne.s32.totalorder %s92, %s93
      %p102 = scmp.eq.s32.totalorder %s19, 0
      %p103 = por %p101, %p102
      %p104 = scmp.ne.s32.totalorder %s92, %s93
      %p105 = scmp.eq.s32.totalorder %s20, 1
      %p106 = por %p104, %p105
      %p108 = scmp.ne.s32.totalorder %s93, %s107
      %p109 = scmp.eq.s32.totalorder %s20, 0
      %p110 = por %p108, %p109
      %s112 = sadd.s32 %s111, 1
      %p115 = scmp.eq.s32.totalorder %s14, 1
      %p116 = scmp.ne.s32.totalorder %s111, %s113
      %p117 = scmp.eq.s32.totalorder %s14, 0
      %p118 = por %p116, %p117
      %p119 = scmp.ne.s32.totalorder %s111, %s113
      %p120 = scmp.eq.s32.totalorder %s19, 1
      %p121 = por %p119, %p120
      %p122 = scmp.ne.s32.totalorder %s113, %s114
      %p123 = scmp.eq.s32.totalorder %s19, 0
      %p124 = por %p122, %p123
      %p125 = scmp.ne.s32.totalorder %s113, %s114
      %p126 = scmp.eq.s32.totalorder %s20, 1
      %p127 = por %p125, %p126
      %p129 = scmp.ne.s32.totalorder %s114, %s128
      %p130 = scmp.eq.s32.totalorder %s20, 0
      %p131 = por %p129, %p130
      %s132 = ssub.s32 %s14, %s21
      %p133 = scmp.eq.s32.totalorder %s132, 0
      %s135 = sadd.s32 %s134, 1
      %s136 = scalar_select %p133, %s134, %s135
      %p139 = pneg %p133
      %p140 = scmp.eq.s32.totalorder %s14, 1
      %p141 = por %p139, %p140
      %p142 = scmp.ne.s32.totalorder %s134, %s137
      %p143 = scmp.eq.s32.totalorder %s14, 0
      %p144 = por %p142, %p143
      %p145 = scmp.ne.s32.totalorder %s134, %s137
      %p146 = scmp.eq.s32.totalorder %s19, 1
      %p147 = por %p145, %p146
      %p148 = scmp.ne.s32.totalorder %s137, %s138
      %p149 = scmp.eq.s32.totalorder %s19, 0
      %p150 = por %p148, %p149
      %p151 = scmp.ne.s32.totalorder %s137, %s138
      %p152 = scmp.eq.s32.totalorder %s20, 1
      %p153 = por %p151, %p152
      %p155 = scmp.ne.s32.totalorder %s138, %s154
      %p156 = scmp.eq.s32.totalorder %s20, 0
      %p157 = por %p155, %p156
      %p158 = scmp.le.s32.totalorder 1, %s14
      %p159 = scmp.lt.s32.totalorder %s14, 3
      %p160 = pnand %p158, %p159
      %p161 = pneg %p160
      // Predicated region
      $region9: #{tpu_custom_call.1} parent=5 // pred_check
        _
      $region10: #{tpu_custom_call.1} parent=5 // pred_check_branch
        %163 = sbr.rel (%p160) target = $region12
      $region11: #{tpu_custom_call.1} parent=5 // pred_region
        %s164 = ssub.s32 %s14, 1
        // Predicated region
        $region13: #{tpu_custom_call.1} parent=11 // pred_check
          %p165 = pneg %p61
        $region14: #{tpu_custom_call.1} parent=11 // pred_check_branch
          %167 = sbr.rel (%p165) target = $region16
        $region15: #{tpu_custom_call.1} parent=11 // pred_region
          _
        $region16: #{tpu_custom_call.1} parent=11 // pred_fallthru
          _
        // Predicated region
        $region17: #{tpu_custom_call.1} parent=11 // pred_check
          %p168 = pneg %p82
        $region18: #{tpu_custom_call.1} parent=11 // pred_check_branch
          %170 = sbr.rel (%p168) target = $region20
        $region19: #{tpu_custom_call.1} parent=11 // pred_region
          _
        $region20: #{tpu_custom_call.1} parent=11 // pred_fallthru
          _
        // Predicated region
        $region21: #{tpu_custom_call.1} parent=11 // pred_check
          %p171 = pneg %p103
        $region22: #{tpu_custom_call.1} parent=11 // pred_check_branch
          %173 = sbr.rel (%p171) target = $region24
        $region23: #{tpu_custom_call.1} parent=11 // pred_region
          _
        $region24: #{tpu_custom_call.1} parent=11 // pred_fallthru
          _
        // Predicated region
        $region25: #{tpu_custom_call.1} parent=11 // pred_check
          %p174 = pneg %p124
        $region26: #{tpu_custom_call.1} parent=11 // pred_check_branch
          %176 = sbr.rel (%p174) target = $region28
        $region27: #{tpu_custom_call.1} parent=11 // pred_region
          _
        $region28: #{tpu_custom_call.1} parent=11 // pred_fallthru
          _
      $region12: #{tpu_custom_call.1} parent=5 // pred_fallthru
        _
      %p177 = scmp.lt.s32.totalorder %s14, 2
      // Predicated region
      $region29: #{tpu_custom_call.1} parent=5 // pred_check
        %p178 = pneg %p177
      $region30: #{tpu_custom_call.1} parent=5 // pred_check_branch
        %180 = sbr.rel (%p178) target = $region32
      $region31: #{tpu_custom_call.1} parent=5 // pred_region
        // Predicated region
        $region33: #{tpu_custom_call.1} parent=31 // pred_check
          %p181 = pneg %p34
        $region34: #{tpu_custom_call.1} parent=31 // pred_check_branch
          %183 = sbr.rel (%p181) target = $region36
        $region35: #{tpu_custom_call.1} parent=31 // pred_region
          %s184 = smul.u32 4, %s14
          %p185 = scmp.lt.s32.totalorder %s184, 7
          %s186 = scalar_select %p185, %s184, 7
          %s187 = smul.addr %s186, 4
          %s188 = scalar_lea.vmem %s0, %s187
          %s189 = smul.u32 4, %s14
        $region36: #{tpu_custom_call.1} parent=31 // pred_fallthru
          _
      $region32: #{tpu_custom_call.1} parent=5 // pred_fallthru
        _
      %p190 = scmp.le.s32.totalorder 1, %s14
      %p191 = scmp.lt.s32.totalorder %s14, 3
      %p192 = pnand %p190, %p191
      %p193 = pneg %p192
      // Predicated region
      $region37: #{tpu_custom_call.1} parent=5 // pred_check
        _
      $region38: #{tpu_custom_call.1} parent=5 // pred_check_branch
        %195 = sbr.rel (%p192) target = $region40
      $region39: #{tpu_custom_call.1} parent=5 // pred_region
        %s196 = ssub.s32 %s14, 1
        %s197 = smul.u32 4, %s19
        %p198 = scmp.lt.s32.totalorder %s197, 7
        %s199 = scalar_select %p198, %s197, 7
        %s200 = smul.addr %s199, 4
        %s201 = scalar_lea.vmem %s0, %s200
        %p202 = pneg %p40
        %p203 = pneg %p37
        %p204 = pneg %p61
        %p205 = pneg %p58
        %p206 = pneg %p82
        %p207 = pneg %p79
        %p208 = pneg %p103
        %p209 = pneg %p100
        %p210 = pneg %p124
        %p211 = pneg %p121
        %p212 = pneg %p150
        %p213 = pneg %p147
        %s214 = sand.u32 %s137, 1
        %s215 = scalar_lea.sflag [#allocation3], %s214
        %s216 = sand.u32 %s137, 1
        %s217 = smul.addr %s216, 8
        %s218 = scalar_lea.vmem [#allocation2], %s217
        %s219 = smul.u32 4, %s19
        %p220 = scmp.lt.s32.totalorder %s219, 7
        %s221 = scalar_select %p220, %s219, 7
        %s222 = smul.addr %s221, 4
        %s223 = scalar_lea.vmem %s0, %s222
        %s224 = smul.u32 4, %s19
        %s225 = smul.u32 4, %s19
        %v226 = vld [vmem:[%s1] sm:$0xff]
        %v227 = vld [vmem:[%s1 + $0x8] sm:$0xff]
        %v228 = vld [vmem:[%s1 + $0x10] sm:$0xff]
        %v229 = vld [vmem:[%s1 + $0x18] sm:$0xff]
        %v230 = vld [vmem:[%s223] sm:$0xff]
        %v231 = vld [vmem:[%s223 + $0x8] sm:$0xff]
        %v232 = vld [vmem:[%s2] sm:$0xff]
        %v233 = vld [vmem:[%s2 + $0x8] sm:$0xff]
        %v234 = vld [vmem:[%s2 + $0x10] sm:$0xff]
        %v235 = vld [vmem:[%s2 + $0x18] sm:$0xff]
        %237 = vset.pattern.permute.xlu0 0
        %238 = vperm.xlu0 %237, %v232
        %v239 = vpop.permute.xlu0 %238
        %242 = vset.pattern.permute.xlu0 0
        %243 = vperm.xlu0 %242, %v233
        %v244 = vpop.permute.xlu0 %243
        %247 = vset.pattern.permute.xlu0 0
        %248 = vperm.xlu0 %247, %v234
        %v249 = vpop.permute.xlu0 %248
        %252 = vset.pattern.permute.xlu0 0
        %253 = vperm.xlu0 %252, %v235
        %v254 = vpop.permute.xlu0 %253
        %v258 = vcombine.high %v230, %v230
        %v259 = vcombine.high %v231, %v231
        %vm260 = vcmask 31744
        %v262 = vsel %vm260, %v226, 0
        %v265 = vsel %vm260, %v227, 0
        %v268 = vsel %vm260, %v228, 0
        %v271 = vsel %vm260, %v229, 0
        %vm273 = vcmask 1043456
        %v274 = vsel %vm273, %v230, 0
        %v276 = vsel %vm273, %v258, 0
        %v278 = vsel %vm273, %v231, 0
        %v280 = vsel %vm273, %v259, 0
        %282 = vmatprep.subr.mxu0 %v276
        %283 = vmatpush1.msra.mxu0 %v274
        %284 = vmatprep.subr.mxu0 0.0
        %285 = vmatpush1.msra.mxu0 0.0
        %286 = vmatprep.subr.mxu0 0.0
        %287 = vmatpush1.msra.mxu0 0.0
        %288 = vmatprep.subr.mxu0 0.0
        %289 = vmatpush1.msra.mxu0 0.0
        %290 = vmatprep.subr.mxu0 0.0
        %291 = vmatpush1.msra.mxu0 0.0
        %292 = vmatprep.subr.mxu0 0.0
        %293 = vmatpush1.msra.mxu0 0.0
        %294 = vmatprep.subr.mxu0 0.0
        %295 = vmatpush1.msra.mxu0 0.0
        %296 = vmatprep.subr.mxu0 0.0
        %297 = vmatpush1.msra.mxu0 0.0
        %298 = vmatprep.subr.mxu0 0.0
        %299 = vmatpush1.msra.mxu0 0.0
        %300 = vmatprep.subr.mxu0 0.0
        %301 = vmatpush1.msra.mxu0 0.0
        %302 = vmatprep.subr.mxu0 0.0
        %303 = vmatpush1.msra.mxu0 0.0
        %304 = vmatprep.subr.mxu0 0.0
        %305 = vmatpush1.msra.mxu0 0.0
        %306 = vmatprep.subr.mxu0 0.0
        %307 = vmatpush1.msra.mxu0 0.0
        %308 = vmatprep.subr.mxu0 0.0
        %309 = vmatpush1.msra.mxu0 0.0
        %310 = vmatprep.subr.mxu0 0.0
        %311 = vmatpush1.msra.mxu0 0.0
        %312 = vmatprep.subr.mxu0 0.0
        %313 = vmatpush1.msra.mxu0 0.0
        %314 = vmatprep.subr.mxu0 0.0
        %315 = vmatpush1.msra.mxu0 0.0
        %316 = vmatprep.subr.mxu0 0.0
        %317 = vmatpush1.msra.mxu0 0.0
        %318 = vmatprep.subr.mxu0 0.0
        %319 = vmatpush1.msra.mxu0 0.0
        %320 = vmatprep.subr.mxu0 0.0
        %321 = vmatpush1.msra.mxu0 0.0
        %322 = vmatprep.subr.mxu0 0.0
        %323 = vmatpush1.msra.mxu0 0.0
        %324 = vmatprep.subr.mxu0 0.0
        %325 = vmatpush1.msra.mxu0 0.0
        %326 = vmatprep.subr.mxu0 0.0
        %327 = vmatpush1.msra.mxu0 0.0
        %328 = vmatprep.subr.mxu0 0.0
        %329 = vmatpush1.msra.mxu0 0.0
        %330 = vmatprep.subr.mxu0 0.0
        %331 = vmatpush1.msra.mxu0 0.0
        %332 = vmatprep.subr.mxu0 0.0
        %333 = vmatpush1.msra.mxu0 0.0
        %334 = vmatprep.subr.mxu0 0.0
        %335 = vmatpush1.msra.mxu0 0.0
        %336 = vmatprep.subr.mxu0 0.0
        %337 = vmatpush1.msra.mxu0 0.0
        %338 = vmatprep.subr.mxu0 0.0
        %339 = vmatpush1.msra.mxu0 0.0
        %340 = vmatprep.subr.mxu0 0.0
        %341 = vmatpush1.msra.mxu0 0.0
        %342 = vmatprep.subr.mxu0 0.0
        %343 = vmatpush1.msra.mxu0 0.0
        %344 = vmatprep.subr.mxu0 0.0
        %345 = vmatpush1.msra.mxu0 0.0
        %346 = vmatprep.mubr.f32.mxu0 0.0
        %347 = vmatmul.mubr.f32.gmra.mrb[0].mxu0 %v262
        %v348 = vpop.f32.mrb[0].mxu0
        %v349 = vadd.f32 %v239, %v348
        %v350 = vpop.f32.mrb[0].mxu0
        %v351 = vadd.f32 %v239, %v350
        %352 = vmatprep.mubr.f32.mxu0 0.0
        %353 = vmatmul.mubr.f32.gmra.mrb[0].mxu0 %v265
        %v354 = vpop.f32.mrb[0].mxu0
        %v355 = vadd.f32 %v244, %v354
        %v356 = vpop.f32.mrb[0].mxu0
        %v357 = vadd.f32 %v244, %v356
        %358 = vmatprep.mubr.f32.mxu0 0.0
        %359 = vmatmul.mubr.f32.gmra.mrb[0].mxu0 %v268
        %v360 = vpop.f32.mrb[0].mxu0
        %v361 = vadd.f32 %v249, %v360
        %v362 = vpop.f32.mrb[0].mxu0
        %v363 = vadd.f32 %v249, %v362
        %364 = vmatprep.mubr.f32.mxu0 0.0
        %365 = vmatmul.mubr.f32.gmra.mrb[0].mxu0 %v271
        %v366 = vpop.f32.mrb[0].mxu0
        %v367 = vadd.f32 %v254, %v366
        %v368 = vpop.f32.mrb[0].mxu0
        %v369 = vadd.f32 %v254, %v368
        %370 = vdwg.mxu0
        %371 = vmatprep.subr.mxu0 %v280
        %372 = vmatpush1.msra.mxu0 %v278
        %373 = vmatprep.subr.mxu0 0.0
        %374 = vmatpush1.msra.mxu0 0.0
        %375 = vmatprep.subr.mxu0 0.0
        %376 = vmatpush1.msra.mxu0 0.0
        %377 = vmatprep.subr.mxu0 0.0
        %378 = vmatpush1.msra.mxu0 0.0
        %379 = vmatprep.subr.mxu0 0.0
        %380 = vmatpush1.msra.mxu0 0.0
        %381 = vmatprep.subr.mxu0 0.0
        %382 = vmatpush1.msra.mxu0 0.0
        %383 = vmatprep.subr.mxu0 0.0
        %384 = vmatpush1.msra.mxu0 0.0
        %385 = vmatprep.subr.mxu0 0.0
        %386 = vmatpush1.msra.mxu0 0.0
        %387 = vmatprep.subr.mxu0 0.0
        %388 = vmatpush1.msra.mxu0 0.0
        %389 = vmatprep.subr.mxu0 0.0
        %390 = vmatpush1.msra.mxu0 0.0
        %391 = vmatprep.subr.mxu0 0.0
        %392 = vmatpush1.msra.mxu0 0.0
        %393 = vmatprep.subr.mxu0 0.0
        %394 = vmatpush1.msra.mxu0 0.0
        %395 = vmatprep.subr.mxu0 0.0
        %396 = vmatpush1.msra.mxu0 0.0
        %397 = vmatprep.subr.mxu0 0.0
        %398 = vmatpush1.msra.mxu0 0.0
        %399 = vmatprep.subr.mxu0 0.0
        %400 = vmatpush1.msra.mxu0 0.0
        %401 = vmatprep.subr.mxu0 0.0
        %402 = vmatpush1.msra.mxu0 0.0
        %403 = vmatprep.subr.mxu0 0.0
        %404 = vmatpush1.msra.mxu0 0.0
        %405 = vmatprep.subr.mxu0 0.0
        %406 = vmatpush1.msra.mxu0 0.0
        %407 = vmatprep.subr.mxu0 0.0
        %408 = vmatpush1.msra.mxu0 0.0
        %409 = vmatprep.subr.mxu0 0.0
        %410 = vmatpush1.msra.mxu0 0.0
        %411 = vmatprep.subr.mxu0 0.0
        %412 = vmatpush1.msra.mxu0 0.0
        %413 = vmatprep.subr.mxu0 0.0
        %414 = vmatpush1.msra.mxu0 0.0
        %415 = vmatprep.subr.mxu0 0.0
        %416 = vmatpush1.msra.mxu0 0.0
        %417 = vmatprep.subr.mxu0 0.0
        %418 = vmatpush1.msra.mxu0 0.0
        %419 = vmatprep.subr.mxu0 0.0
        %420 = vmatpush1.msra.mxu0 0.0
        %421 = vmatprep.subr.mxu0 0.0
        %422 = vmatpush1.msra.mxu0 0.0
        %423 = vmatprep.subr.mxu0 0.0
        %424 = vmatpush1.msra.mxu0 0.0
        %425 = vmatprep.subr.mxu0 0.0
        %426 = vmatpush1.msra.mxu0 0.0
        %427 = vmatprep.subr.mxu0 0.0
        %428 = vmatpush1.msra.mxu0 0.0
        %429 = vmatprep.subr.mxu0 0.0
        %430 = vmatpush1.msra.mxu0 0.0
        %431 = vmatprep.subr.mxu0 0.0
        %432 = vmatpush1.msra.mxu0 0.0
        %433 = vmatprep.subr.mxu0 0.0
        %434 = vmatpush1.msra.mxu0 0.0
        %435 = vmatprep.mubr.f32.mxu0 0.0
        %436 = vmatmul.mubr.f32.gmra.mrb[0].mxu0 %v262
        %v437 = vpop.f32.mrb[0].mxu0
        %v438 = vadd.f32 %v239, %v437
        %v439 = vpop.f32.mrb[0].mxu0
        %v440 = vadd.f32 %v239, %v439
        %441 = vmatprep.mubr.f32.mxu0 0.0
        %442 = vmatmul.mubr.f32.gmra.mrb[0].mxu0 %v265
        %v443 = vpop.f32.mrb[0].mxu0
        %v444 = vadd.f32 %v244, %v443
        %v445 = vpop.f32.mrb[0].mxu0
        %v446 = vadd.f32 %v244, %v445
        %447 = vmatprep.mubr.f32.mxu0 0.0
        %448 = vmatmul.mubr.f32.gmra.mrb[0].mxu0 %v268
        %v449 = vpop.f32.mrb[0].mxu0
        %v450 = vadd.f32 %v249, %v449
        %v451 = vpop.f32.mrb[0].mxu0
        %v452 = vadd.f32 %v249, %v451
        %453 = vmatprep.mubr.f32.mxu0 0.0
        %454 = vmatmul.mubr.f32.gmra.mrb[0].mxu0 %v271
        %v455 = vpop.f32.mrb[0].mxu0
        %v456 = vadd.f32 %v254, %v455
        %v457 = vpop.f32.mrb[0].mxu0
        %v458 = vadd.f32 %v254, %v457
        %459 = vdwg.mxu0
        %v460 = vmax.f32 %v349, 0.0
        %v461 = vmax.f32 %v351, 0.0
        %v462 = vmax.f32 %v438, 0.0
        %v463 = vmax.f32 %v440, 0.0
        %v464 = vmax.f32 %v355, 0.0
        %v465 = vmax.f32 %v357, 0.0
        %v466 = vmax.f32 %v444, 0.0
        %v467 = vmax.f32 %v446, 0.0
        %v468 = vmax.f32 %v361, 0.0
        %v469 = vmax.f32 %v363, 0.0
        %v470 = vmax.f32 %v450, 0.0
        %v471 = vmax.f32 %v452, 0.0
        %v472 = vmax.f32 %v367, 0.0
        %v473 = vmax.f32 %v369, 0.0
        %v474 = vmax.f32 %v456, 0.0
        %v475 = vmax.f32 %v458, 0.0
        %v476 = vld [vmem:[%s3] sm:$0x3]
        %v477 = vld [vmem:[%s4] sm:$0x3]
        %479 = vset.pattern.permute.xlu0 0
        %480 = vperm.xlu0 %479, %v477
        %v481 = vpop.permute.xlu0 %480
        %vm483 = vcmask 261120
        %v485 = vsel %vm483, %v476, 0
        %487 = vmatprep.subr.mxu0 %v461
        %488 = vmatpush1.msra.mxu0 %v460
        %489 = vmatprep.subr.mxu0 %v465
        %490 = vmatpush1.msra.mxu0 %v464
        %491 = vmatprep.subr.mxu0 %v469
        %492 = vmatpush1.msra.mxu0 %v468
        %493 = vmatprep.subr.mxu0 %v473
        %494 = vmatpush1.msra.mxu0 %v472
        %495 = vmatprep.subr.mxu0 0.0
        %496 = vmatpush1.msra.mxu0 0.0
        %497 = vmatprep.subr.mxu0 0.0
        %498 = vmatpush1.msra.mxu0 0.0
        %499 = vmatprep.subr.mxu0 0.0
        %500 = vmatpush1.msra.mxu0 0.0
        %501 = vmatprep.subr.mxu0 0.0
        %502 = vmatpush1.msra.mxu0 0.0
        %503 = vmatprep.subr.mxu0 0.0
        %504 = vmatpush1.msra.mxu0 0.0
        %505 = vmatprep.subr.mxu0 0.0
        %506 = vmatpush1.msra.mxu0 0.0
        %507 = vmatprep.subr.mxu0 0.0
        %508 = vmatpush1.msra.mxu0 0.0
        %509 = vmatprep.subr.mxu0 0.0
        %510 = vmatpush1.msra.mxu0 0.0
        %511 = vmatprep.subr.mxu0 0.0
        %512 = vmatpush1.msra.mxu0 0.0
        %513 = vmatprep.subr.mxu0 0.0
        %514 = vmatpush1.msra.mxu0 0.0
        %515 = vmatprep.subr.mxu0 0.0
        %516 = vmatpush1.msra.mxu0 0.0
        %517 = vmatprep.subr.mxu0 0.0
        %518 = vmatpush1.msra.mxu0 0.0
        %519 = vmatprep.subr.mxu0 0.0
        %520 = vmatpush1.msra.mxu0 0.0
        %521 = vmatprep.subr.mxu0 0.0
        %522 = vmatpush1.msra.mxu0 0.0
        %523 = vmatprep.subr.mxu0 0.0
        %524 = vmatpush1.msra.mxu0 0.0
        %525 = vmatprep.subr.mxu0 0.0
        %526 = vmatpush1.msra.mxu0 0.0
        %527 = vmatprep.subr.mxu0 0.0
        %528 = vmatpush1.msra.mxu0 0.0
        %529 = vmatprep.subr.mxu0 0.0
        %530 = vmatpush1.msra.mxu0 0.0
        %531 = vmatprep.subr.mxu0 0.0
        %532 = vmatpush1.msra.mxu0 0.0
        %533 = vmatprep.subr.mxu0 0.0
        %534 = vmatpush1.msra.mxu0 0.0
        %535 = vmatprep.subr.mxu0 0.0
        %536 = vmatpush1.msra.mxu0 0.0
        %537 = vmatprep.subr.mxu0 0.0
        %538 = vmatpush1.msra.mxu0 0.0
        %539 = vmatprep.subr.mxu0 0.0
        %540 = vmatpush1.msra.mxu0 0.0
        %541 = vmatprep.subr.mxu0 0.0
        %542 = vmatpush1.msra.mxu0 0.0
        %543 = vmatprep.subr.mxu0 0.0
        %544 = vmatpush1.msra.mxu0 0.0
        %545 = vmatprep.subr.mxu0 0.0
        %546 = vmatpush1.msra.mxu0 0.0
        %547 = vmatprep.subr.mxu0 0.0
        %548 = vmatpush1.msra.mxu0 0.0
        %549 = vmatprep.subr.mxu0 0.0
        %550 = vmatpush1.msra.mxu0 0.0
        %551 = vmatprep.mubr.f32.mxu0 0.0
        %552 = vmatmul.mubr.f32.gmra.mrb[0].mxu0 %v485
        %v553 = vpop.f32.mrb[0].mxu0
        %v554 = vadd.f32 %v481, %v553
        %v555 = vpop.f32.mrb[0].mxu0
        %v556 = vadd.f32 %v481, %v555
        %557 = vdwg.mxu0
        %558 = vmatprep.subr.mxu0 %v463
        %559 = vmatpush1.msra.mxu0 %v462
        %560 = vmatprep.subr.mxu0 %v467
        %561 = vmatpush1.msra.mxu0 %v466
        %562 = vmatprep.subr.mxu0 %v471
        %563 = vmatpush1.msra.mxu0 %v470
        %564 = vmatprep.subr.mxu0 %v475
        %565 = vmatpush1.msra.mxu0 %v474
        %566 = vmatprep.subr.mxu0 0.0
        %567 = vmatpush1.msra.mxu0 0.0
        %568 = vmatprep.subr.mxu0 0.0
        %569 = vmatpush1.msra.mxu0 0.0
        %570 = vmatprep.subr.mxu0 0.0
        %571 = vmatpush1.msra.mxu0 0.0
        %572 = vmatprep.subr.mxu0 0.0
        %573 = vmatpush1.msra.mxu0 0.0
        %574 = vmatprep.subr.mxu0 0.0
        %575 = vmatpush1.msra.mxu0 0.0
        %576 = vmatprep.subr.mxu0 0.0
        %577 = vmatpush1.msra.mxu0 0.0
        %578 = vmatprep.subr.mxu0 0.0
        %579 = vmatpush1.msra.mxu0 0.0
        %580 = vmatprep.subr.mxu0 0.0
        %581 = vmatpush1.msra.mxu0 0.0
        %582 = vmatprep.subr.mxu0 0.0
        %583 = vmatpush1.msra.mxu0 0.0
        %584 = vmatprep.subr.mxu0 0.0
        %585 = vmatpush1.msra.mxu0 0.0
        %586 = vmatprep.subr.mxu0 0.0
        %587 = vmatpush1.msra.mxu0 0.0
        %588 = vmatprep.subr.mxu0 0.0
        %589 = vmatpush1.msra.mxu0 0.0
        %590 = vmatprep.subr.mxu0 0.0
        %591 = vmatpush1.msra.mxu0 0.0
        %592 = vmatprep.subr.mxu0 0.0
        %593 = vmatpush1.msra.mxu0 0.0
        %594 = vmatprep.subr.mxu0 0.0
        %595 = vmatpush1.msra.mxu0 0.0
        %596 = vmatprep.subr.mxu0 0.0
        %597 = vmatpush1.msra.mxu0 0.0
        %598 = vmatprep.subr.mxu0 0.0
        %599 = vmatpush1.msra.mxu0 0.0
        %600 = vmatprep.subr.mxu0 0.0
        %601 = vmatpush1.msra.mxu0 0.0
        %602 = vmatprep.subr.mxu0 0.0
        %603 = vmatpush1.msra.mxu0 0.0
        %604 = vmatprep.subr.mxu0 0.0
        %605 = vmatpush1.msra.mxu0 0.0
        %606 = vmatprep.subr.mxu0 0.0
        %607 = vmatpush1.msra.mxu0 0.0
        %608 = vmatprep.subr.mxu0 0.0
        %609 = vmatpush1.msra.mxu0 0.0
        %610 = vmatprep.subr.mxu0 0.0
        %611 = vmatpush1.msra.mxu0 0.0
        %612 = vmatprep.subr.mxu0 0.0
        %613 = vmatpush1.msra.mxu0 0.0
        %614 = vmatprep.subr.mxu0 0.0
        %615 = vmatpush1.msra.mxu0 0.0
        %616 = vmatprep.subr.mxu0 0.0
        %617 = vmatpush1.msra.mxu0 0.0
        %618 = vmatprep.subr.mxu0 0.0
        %619 = vmatpush1.msra.mxu0 0.0
        %620 = vmatprep.subr.mxu0 0.0
        %621 = vmatpush1.msra.mxu0 0.0
        %622 = vmatprep.mubr.f32.mxu0 0.0
        %623 = vmatmul.mubr.f32.gmra.mrb[0].mxu0 %v485
        %v624 = vpop.f32.mrb[0].mxu0
        %v625 = vadd.f32 %v481, %v624
        %v626 = vpop.f32.mrb[0].mxu0
        %v627 = vadd.f32 %v481, %v626
        %628 = vdwg.mxu0
        %v633 = vrot.slane %v554, 7
        %v634 = vrot.slane %v556, 7
        %v635 = vrot.slane %v625, 7
        %v636 = vrot.slane %v627, 7
        %v641 = vsub.f32 %v554, %v633
        %v642 = vsub.f32 %v556, %v634
        %v643 = vsub.f32 %v625, %v635
        %v644 = vsub.f32 %v627, %v636
        %v645 = vmul.f32 %v641, 1.442695
        %v646 = vpow.pop %v645
        %v647 = vmul.f32 %v642, 1.442695
        %v648 = vpow.pop %v647
        %v649 = vmul.f32 %v643, 1.442695
        %v650 = vpow.pop %v649
        %v651 = vmul.f32 %v644, 1.442695
        %v652 = vpow.pop %v651
        %v653 = vadd.f32 %v646, 1.0
        %v654 = vadd.f32 %v648, 1.0
        %v655 = vadd.f32 %v650, 1.0
        %v656 = vadd.f32 %v652, 1.0
        %v657 = vrcp.pop %v653
        %v658 = vmul.f32 1.0, %v657
        %v659 = vrcp.pop %v654
        %v660 = vmul.f32 1.0, %v659
        %v661 = vrcp.pop %v655
        %v662 = vmul.f32 1.0, %v661
        %v663 = vrcp.pop %v656
        %v664 = vmul.f32 1.0, %v663
        %v665 = vsub.f32 0.0, %v641
        %v666 = vsub.f32 0.0, %v642
        %v667 = vsub.f32 0.0, %v643
        %v668 = vsub.f32 0.0, %v644
        %v669 = vmul.f32 %v665, 1.442695
        %v670 = vpow.pop %v669
        %v671 = vmul.f32 %v666, 1.442695
        %v672 = vpow.pop %v671
        %v673 = vmul.f32 %v667, 1.442695
        %v674 = vpow.pop %v673
        %v675 = vmul.f32 %v668, 1.442695
        %v676 = vpow.pop %v675
        %v677 = vadd.f32 %v670, 1.0
        %v678 = vadd.f32 %v672, 1.0
        %v679 = vadd.f32 %v674, 1.0
        %v680 = vadd.f32 %v676, 1.0
        %v681 = vrcp.pop %v677
        %v682 = vmul.f32 1.0, %v681
        %v683 = vrcp.pop %v678
        %v684 = vmul.f32 1.0, %v683
        %v685 = vrcp.pop %v679
        %v686 = vmul.f32 1.0, %v685
        %v687 = vrcp.pop %v680
        %v688 = vmul.f32 1.0, %v687
        %v693 = vcombine.low %v658, %v660
        %v694 = vcombine.low %v662, %v664
        %v696 = vunpack.c.l.s4 1966171168
        %v697 = vunpack.c.0.s8 %v696
        %v698 = vlaneseq
        %v699 = vshrl.u32 %v698, 7
        %v700 = vsub.s32 %v697, %v699
        %v701 = vrot.slane %v693, %v700
        %v703 = vunpack.c.l.s4 1966171168
        %v704 = vunpack.c.0.s8 %v703
        %v705 = vlaneseq
        %v706 = vshrl.u32 %v705, 7
        %v707 = vsub.s32 %v704, %v706
        %v708 = vrot.slane %v694, %v707
        %v709 = vcombine.high %v701, %v708
        %v711 = vunpack.c.l.s4 1966171168
        %v712 = vunpack.c.0.s8 %v711
        %v713 = vlaneseq
        %v714 = vshrl.u32 %v713, 7
        %v715 = vsub.s32 %v712, %v714
        %v716 = vrot.slane %v709, %v715
        %v718 = vlaneseq
        %vm719 = vcmp.ge.s32.totalorder %v718, 0
        %vm720 = vcmp.lt.s32.totalorder %v718, 512
        %vm721 = vmand %vm719, %vm720
        %722 = vst.msk [vmem:[%s218] ss:$2 sm:$0xf] %vm721, %v716
        %v727 = vcombine.low %v682, %v684
        %v728 = vcombine.low %v686, %v688
        %v730 = vunpack.c.l.s4 1966171168
        %v731 = vunpack.c.0.s8 %v730
        %v732 = vlaneseq
        %v733 = vshrl.u32 %v732, 7
        %v734 = vsub.s32 %v731, %v733
        %v735 = vrot.slane %v727, %v734
        %v737 = vunpack.c.l.s4 1966171168
        %v738 = vunpack.c.0.s8 %v737
        %v739 = vlaneseq
        %v740 = vshrl.u32 %v739, 7
        %v741 = vsub.s32 %v738, %v740
        %v742 = vrot.slane %v728, %v741
        %v743 = vcombine.high %v735, %v742
        %v745 = vunpack.c.l.s4 1966171168
        %v746 = vunpack.c.0.s8 %v745
        %v747 = vlaneseq
        %v748 = vshrl.u32 %v747, 7
        %v749 = vsub.s32 %v746, %v748
        %v750 = vrot.slane %v743, %v749
        %s752 = scalar_lea.vmem %s218, 1 [#allocation2]
        %753 = vst.msk [vmem:[%s752] ss:$2 sm:$0xf] %vm721, %v750
        %s754 = sand.u32 %s137, 1
        %s755 = scalar_lea.sflag [#allocation3], %s754
        %s756 = sand.u32 %s137, 1
        %s757 = smul.addr %s756, 8
        %s758 = scalar_lea.vmem [#allocation2], %s757
        // Predicated region
        $region41: #{tpu_custom_call.1} parent=39 // pred_check
          %p759 = pneg %p147
        $region42: #{tpu_custom_call.1} parent=39 // pred_check_branch
          %761 = sbr.rel (%p759) target = $region44
        $region43: #{tpu_custom_call.1} parent=39 // pred_region
          %s762 = smul.u32 4, %s19
          %s764 = ssub.s32 128, 128
          %765 = vsyncadd %s755, %s764
          %s766 = smul.addr %s762, 32
          %s767 = scalar_lea.hbm %s5, %s766
          %s769 = sshll.u32 %s758, 4
          %s770 = int_to_ptr.vmem [resolvable:$true] %s769
          %772 = dma.vmem_to_hbm [thread:$0]  %s770, 128, %s767, %s755
        $region44: #{tpu_custom_call.1} parent=39 // pred_fallthru
          _
      $region40: #{tpu_custom_call.1} parent=5 // pred_fallthru
        _
      %p773 = scmp.le.s32.totalorder 2, %s14
      // Predicated region
      $region45: #{tpu_custom_call.1} parent=5 // pred_check
        %p774 = pneg %p773
      $region46: #{tpu_custom_call.1} parent=5 // pred_check_branch
        %776 = sbr.rel (%p774) target = $region48
      $region47: #{tpu_custom_call.1} parent=5 // pred_region
        %s777 = ssub.s32 %s14, 2
        // Predicated region
        $region49: #{tpu_custom_call.1} parent=47 // pred_check
          %p778 = pneg %p153
        $region50: #{tpu_custom_call.1} parent=47 // pred_check_branch
          %780 = sbr.rel (%p778) target = $region52
        $region51: #{tpu_custom_call.1} parent=47 // pred_region
          %s781 = sand.u32 %s138, 1
          %s782 = scalar_lea.sflag [#allocation3], %s781
          %s783 = sand.u32 %s138, 1
          %s784 = smul.addr %s783, 8
          %s785 = scalar_lea.vmem [#allocation2], %s784
          %786 = dma.done %s782, 128
        $region52: #{tpu_custom_call.1} parent=47 // pred_fallthru
          _
      $region48: #{tpu_custom_call.1} parent=5 // pred_fallthru
        _
    $region6: #{tpu_custom_call.1} parent=1 // loop_footer
      %s18 = sadd.s32 1, %s14
    $region7: #{tpu_custom_call.1} parent=1 // loop_footer_branch
      %13 = sbr.rel target = $region3
    $region8: #{tpu_custom_call.1} parent=1 // loop_exit
      _
    %787 = vsyncpa [#allocation3], 1
    %s788 = scalar_lea.sflag [#allocation3], 1
    %789 = vsyncpa %s788, 1

</llo_original>
